<compile_context>
chip_gen: v7x
topology: tpu7x:2x2x1
jax: 0.10.0
libtpu: 0.0.40
codegen_flags: <defaults>
</compile_context>

<pallas_src>
import jax
import jax.numpy as jnp
from jax.experimental import pallas as pl
from jax.experimental.pallas import tpu as pltpu


def linear_kernel(x_ref, w_ref, b_ref, o_ref):
    # x_ref: (B, K)  natural nn.Linear input layout            (VMEM)
    # w_ref: (1, K)  weight row, scalar-indexed                 (SMEM)
    # b_ref: (1,)    bias scalar                                (SMEM)
    # o_ref: (B, 1)  natural nn.Linear output layout            (VMEM)
    x = x_ref[...]                       # single vector load, (B, K)
    batch = x.shape[0]
    in_features = x.shape[1]

    # Statically unrolled scalar-broadcast multiply-add accumulation:
    # everything stays on VPU + scalar slots (no MXU pass, no XLU reduce).
    acc = jnp.full((batch, 1), b_ref[0], dtype=jnp.float32)
    for k in range(in_features):         # K = 10, unrolled at trace time
        acc = acc + w_ref[0, k] * x[:, k : k + 1]

    o_ref[...] = acc.astype(o_ref.dtype)


def linear_pallas(x, weight, bias):
    """y = x @ weight.T + bias  (equivalent to torch nn.Linear(10, 1) forward).

    x: (B, K) f32, weight: (N=1, K) f32, bias: (N=1,) f32. Returns (B, 1).
    All operands are passed in their native layouts; no wrapper-side
    transpose/reshape ops.
    """
    batch, in_features = x.shape
    out_features = weight.shape[0]
    assert out_features == 1
    assert weight.shape == (out_features, in_features)
    assert bias.shape == (out_features,)

    return pl.pallas_call(
        linear_kernel,
        out_shape=jax.ShapeDtypeStruct((batch, out_features), x.dtype),
        in_specs=[
            pl.BlockSpec(memory_space=pltpu.MemorySpace.VMEM),  # x      (B, K)
            pl.BlockSpec(memory_space=pltpu.MemorySpace.SMEM),  # weight (1, K)
            pl.BlockSpec(memory_space=pltpu.MemorySpace.SMEM),  # bias   (1,)
        ],
        out_specs=pl.BlockSpec(memory_space=pltpu.MemorySpace.VMEM),
    )(x, weight, bias)


if __name__ == "__main__":
    key = jax.random.PRNGKey(0)
    k_x, k_w, k_b = jax.random.split(key, 3)

    batch, in_features, out_features = 8, 10, 1

    # Deterministic parameter init mimicking nn.Linear(10, 1):
    # weight (1, 10), bias (1,).
    bound = 1.0 / jnp.sqrt(in_features)
    weight = jax.random.uniform(
        k_w, (out_features, in_features), jnp.float32, -bound, bound
    )
    bias = jax.random.uniform(k_b, (out_features,), jnp.float32, -bound, bound)

    x = jax.random.normal(k_x, (batch, in_features), jnp.float32)

    y = linear_pallas(x, weight, bias)
    jax.block_until_ready(y)

    # Sanity check against plain JAX reference.
    y_ref = x @ weight.T + bias
    assert y.shape == (batch, out_features)
    assert jnp.allclose(y, y_ref, atol=1e-5, rtol=1e-5)

    print("KERNEL_OK")
</pallas_src>

<mosaic_0001>
module attributes {stable_mosaic.version = 11 : i64} {
  func.func @linear_kernel(%arg0: memref<8x10xf32, #tpu.memory_space<vmem>>, %arg1: memref<1x10xf32, #tpu.memory_space<smem>>, %arg2: memref<1xf32, #tpu.memory_space<smem>>, %arg3: memref<8x1xf32, #tpu.memory_space<vmem>>) attributes {dimension_semantics = [], scalar_prefetch = 0 : i64, scratch_operands = 0 : i64, tpu.core_type = #tpu.core_type<tc>} {
    %c0 = arith.constant 0 : index
    %c0_0 = arith.constant 0 : index
    %0 = vector.load %arg0[%c0, %c0_0] : memref<8x10xf32, #tpu.memory_space<vmem>>, vector<8x10xf32>
    %c0_1 = arith.constant 0 : index
    %1 = memref.load %arg2[%c0_1] : memref<1xf32, #tpu.memory_space<smem>>
    %2 = vector.broadcast %1 : f32 to vector<8x1xf32>
    %c0_2 = arith.constant 0 : index
    %c0_3 = arith.constant 0 : index
    %3 = memref.load %arg1[%c0_2, %c0_3] : memref<1x10xf32, #tpu.memory_space<smem>>
    %4 = vector.extract_strided_slice %0 {offsets = [0, 0], sizes = [8, 1], strides = [1, 1]} : vector<8x10xf32> to vector<8x1xf32>
    %5 = vector.broadcast %3 : f32 to vector<8x1xf32>
    %6 = arith.mulf %5, %4 : vector<8x1xf32>
    %7 = arith.addf %2, %6 : vector<8x1xf32>
    %c0_4 = arith.constant 0 : index
    %c1 = arith.constant 1 : index
    %8 = memref.load %arg1[%c0_4, %c1] : memref<1x10xf32, #tpu.memory_space<smem>>
    %9 = vector.extract_strided_slice %0 {offsets = [0, 1], sizes = [8, 1], strides = [1, 1]} : vector<8x10xf32> to vector<8x1xf32>
    %10 = vector.broadcast %8 : f32 to vector<8x1xf32>
    %11 = arith.mulf %10, %9 : vector<8x1xf32>
    %12 = arith.addf %7, %11 : vector<8x1xf32>
    %c0_5 = arith.constant 0 : index
    %c2 = arith.constant 2 : index
    %13 = memref.load %arg1[%c0_5, %c2] : memref<1x10xf32, #tpu.memory_space<smem>>
    %14 = vector.extract_strided_slice %0 {offsets = [0, 2], sizes = [8, 1], strides = [1, 1]} : vector<8x10xf32> to vector<8x1xf32>
    %15 = vector.broadcast %13 : f32 to vector<8x1xf32>
    %16 = arith.mulf %15, %14 : vector<8x1xf32>
    %17 = arith.addf %12, %16 : vector<8x1xf32>
    %c0_6 = arith.constant 0 : index
    %c3 = arith.constant 3 : index
    %18 = memref.load %arg1[%c0_6, %c3] : memref<1x10xf32, #tpu.memory_space<smem>>
    %19 = vector.extract_strided_slice %0 {offsets = [0, 3], sizes = [8, 1], strides = [1, 1]} : vector<8x10xf32> to vector<8x1xf32>
    %20 = vector.broadcast %18 : f32 to vector<8x1xf32>
    %21 = arith.mulf %20, %19 : vector<8x1xf32>
    %22 = arith.addf %17, %21 : vector<8x1xf32>
    %c0_7 = arith.constant 0 : index
    %c4 = arith.constant 4 : index
    %23 = memref.load %arg1[%c0_7, %c4] : memref<1x10xf32, #tpu.memory_space<smem>>
    %24 = vector.extract_strided_slice %0 {offsets = [0, 4], sizes = [8, 1], strides = [1, 1]} : vector<8x10xf32> to vector<8x1xf32>
    %25 = vector.broadcast %23 : f32 to vector<8x1xf32>
    %26 = arith.mulf %25, %24 : vector<8x1xf32>
    %27 = arith.addf %22, %26 : vector<8x1xf32>
    %c0_8 = arith.constant 0 : index
    %c5 = arith.constant 5 : index
    %28 = memref.load %arg1[%c0_8, %c5] : memref<1x10xf32, #tpu.memory_space<smem>>
    %29 = vector.extract_strided_slice %0 {offsets = [0, 5], sizes = [8, 1], strides = [1, 1]} : vector<8x10xf32> to vector<8x1xf32>
    %30 = vector.broadcast %28 : f32 to vector<8x1xf32>
    %31 = arith.mulf %30, %29 : vector<8x1xf32>
    %32 = arith.addf %27, %31 : vector<8x1xf32>
    %c0_9 = arith.constant 0 : index
    %c6 = arith.constant 6 : index
    %33 = memref.load %arg1[%c0_9, %c6] : memref<1x10xf32, #tpu.memory_space<smem>>
    %34 = vector.extract_strided_slice %0 {offsets = [0, 6], sizes = [8, 1], strides = [1, 1]} : vector<8x10xf32> to vector<8x1xf32>
    %35 = vector.broadcast %33 : f32 to vector<8x1xf32>
    %36 = arith.mulf %35, %34 : vector<8x1xf32>
    %37 = arith.addf %32, %36 : vector<8x1xf32>
    %c0_10 = arith.constant 0 : index
    %c7 = arith.constant 7 : index
    %38 = memref.load %arg1[%c0_10, %c7] : memref<1x10xf32, #tpu.memory_space<smem>>
    %39 = vector.extract_strided_slice %0 {offsets = [0, 7], sizes = [8, 1], strides = [1, 1]} : vector<8x10xf32> to vector<8x1xf32>
    %40 = vector.broadcast %38 : f32 to vector<8x1xf32>
    %41 = arith.mulf %40, %39 : vector<8x1xf32>
    %42 = arith.addf %37, %41 : vector<8x1xf32>
    %c0_11 = arith.constant 0 : index
    %c8 = arith.constant 8 : index
    %43 = memref.load %arg1[%c0_11, %c8] : memref<1x10xf32, #tpu.memory_space<smem>>
    %44 = vector.extract_strided_slice %0 {offsets = [0, 8], sizes = [8, 1], strides = [1, 1]} : vector<8x10xf32> to vector<8x1xf32>
    %45 = vector.broadcast %43 : f32 to vector<8x1xf32>
    %46 = arith.mulf %45, %44 : vector<8x1xf32>
    %47 = arith.addf %42, %46 : vector<8x1xf32>
    %c0_12 = arith.constant 0 : index
    %c9 = arith.constant 9 : index
    %48 = memref.load %arg1[%c0_12, %c9] : memref<1x10xf32, #tpu.memory_space<smem>>
    %49 = vector.extract_strided_slice %0 {offsets = [0, 9], sizes = [8, 1], strides = [1, 1]} : vector<8x10xf32> to vector<8x1xf32>
    %50 = vector.broadcast %48 : f32 to vector<8x1xf32>
    %51 = arith.mulf %50, %49 : vector<8x1xf32>
    %52 = arith.addf %47, %51 : vector<8x1xf32>
    %c0_13 = arith.constant 0 : index
    %c0_14 = arith.constant 0 : index
    %53 = vector.load %arg3[%c0_13, %c0_14] : memref<8x1xf32, #tpu.memory_space<vmem>>, vector<8x1xf32>
    tpu.vector_store %arg3[%c0_13, %c0_14], %52 {strides = array<i32>} : memref<8x1xf32, #tpu.memory_space<vmem>>, vector<8x1xf32>,
    return
  }
}

</mosaic_0001>

<llo_original>
// kernel: tpu_custom_call.1
$region0: #{tpu_custom_call.1}
  #allocation0 [shape = 'u32[]', space=smem, size = 0x4, offset = 0x4, fixed_abs, tag = 'smem constant byte address 0x4 - core index']
  #allocation1 [shape = 'u32[144,128]{1,0:T(1,128)}', space=vmem, size = 0x12000, scoped, tag = 'internal scratch']
  #allocation2 [shape = 'f32[1]{0:T(128)S(6)}', space=smem, size = 0x200, scoped, tag = 'scoped memory for tpu_custom_call.1']
  %s0 = inlined_call_operand.hbm [shape: f32[8,10], index: 0, kind: input, shape index: {}]
  %s1 = inlined_call_operand.vmem [shape: f32[1,10], index: 1, kind: input, shape index: {}]
  %s2 = inlined_call_operand.<no memory space> [shape: f32[1], index: 2, kind: input, shape index: {}]
  %s3 = inlined_call_operand.vmem [shape: f32[8,1], index: 3, kind: output, shape index: {}]
  %s4 = sld [smem:[#allocation0]]
  $region30: #{tpu_custom_call.1} parent=0
    _
  %s6 = ssub.s32 1, %s4
  %s7 = scalar_select 0, %s6, %s4
  %8 = sst [smem:[#allocation2]] %s2
  $region1: #{tpu_custom_call.1} parent=0
    #allocation3 [shape = 'u8[4096]{0}', space=vmem, size = 0x1000, scoped, tag = 'input window, operand 0, single buffered']
    #allocation4 [shape = 's32[1]{0}', space=sflag, size = 0x4, scoped, tag = 'scoped memory for tpu_custom_call.1']
    #allocation5 [shape = 's32[1]{0}', space=sflag, size = 0x4, scoped, tag = 'scoped memory for tpu_custom_call.1']
    #allocation6 [shape = 'u8[512]{0}', space=smem, size = 0x200, scoped, tag = 'input window, operand 1, single buffered']
    %9 = vsyncpa [#allocation4], 0
    %10 = vsyncpa [#allocation5], 0
    // Predicated region
    $region2: #{tpu_custom_call.1} parent=1 // pred_check
      _
    $region3: #{tpu_custom_call.1} parent=1 // pred_check_branch
      %12 = sbr.rel (0) target = $region5
    $region4: #{tpu_custom_call.1} parent=1 // pred_region
      %s14 = ssub.s32 128, 128
      %15 = vsyncadd [#allocation4], %s14
      %s17 = sshll.u32 [#allocation3], 4
      %s18 = int_to_ptr.vmem [resolvable:$true] %s17
      %20 = dma.hbm_to_vmem [thread:$0]  %s0, 128, %s18, [#allocation4]
    $region5: #{tpu_custom_call.1} parent=1 // pred_fallthru
      _
    // Predicated region
    $region6: #{tpu_custom_call.1} parent=1 // pred_check
      _
    $region7: #{tpu_custom_call.1} parent=1 // pred_check_branch
      %22 = sbr.rel (0) target = $region9
    $region8: #{tpu_custom_call.1} parent=1 // pred_region
      %s24 = ssub.s32 16, 16
      %25 = vsyncadd [#allocation5], %s24
      %s27 = sshll.u32 %s1, 4
      %s28 = int_to_ptr.vmem [resolvable:$true] %s27
      %30 = dma.vmem_to_smem %s28, 16, [#allocation6], [#allocation5]
    $region9: #{tpu_custom_call.1} parent=1 // pred_fallthru
      _
    // Predicated region
    $region10: #{tpu_custom_call.1} parent=1 // pred_check
      _
    $region11: #{tpu_custom_call.1} parent=1 // pred_check_branch
      %32 = sbr.rel (0) target = $region13
    $region12: #{tpu_custom_call.1} parent=1 // pred_region
      _
    $region13: #{tpu_custom_call.1} parent=1 // pred_fallthru
      _
    // Predicated region
    $region14: #{tpu_custom_call.1} parent=1 // pred_check
      _
    $region15: #{tpu_custom_call.1} parent=1 // pred_check_branch
      %34 = sbr.rel (0) target = $region17
    $region16: #{tpu_custom_call.1} parent=1 // pred_region
      %35 = dma.done [#allocation4], 128
    $region17: #{tpu_custom_call.1} parent=1 // pred_fallthru
      _
    // Predicated region
    $region18: #{tpu_custom_call.1} parent=1 // pred_check
      _
    $region19: #{tpu_custom_call.1} parent=1 // pred_check_branch
      %37 = sbr.rel (0) target = $region21
    $region20: #{tpu_custom_call.1} parent=1 // pred_region
      %38 = dma.done [#allocation5], 16
    $region21: #{tpu_custom_call.1} parent=1 // pred_fallthru
      _
    %39 = sfence
    %v40 = vld [vmem:[#allocation3] sm:$0xff]
    %s41 = sld [smem:[#allocation2]]
    %v42 = vstv %s41
    %s43 = sld [smem:[#allocation6]]
    %v44 = vstv %s43
    %v45 = vmul.f32 %v44, %v40
    %v46 = vadd.f32 %v42, %v45
    %s47 = sld [smem:[#allocation6 + $0x1]]
    %v48 = vstv %s47
    %v49 = vmul.f32 %v48, %v40
    %51 = vrot.lane.b32.xlu0 %v49, 127
    %v52 = vpop.permute.xlu0 %51
    %v54 = vadd.f32 %v46, %v52
    %s55 = sld [smem:[#allocation6 + $0x2]]
    %v56 = vstv %s55
    %v57 = vmul.f32 %v56, %v40
    %59 = vrot.lane.b32.xlu0 %v57, 126
    %v60 = vpop.permute.xlu0 %59
    %v62 = vadd.f32 %v54, %v60
    %s63 = sld [smem:[#allocation6 + $0x3]]
    %v64 = vstv %s63
    %v65 = vmul.f32 %v64, %v40
    %67 = vrot.lane.b32.xlu0 %v65, 125
    %v68 = vpop.permute.xlu0 %67
    %v70 = vadd.f32 %v62, %v68
    %s71 = sld [smem:[#allocation6 + $0x4]]
    %v72 = vstv %s71
    %v73 = vmul.f32 %v72, %v40
    %75 = vrot.lane.b32.xlu0 %v73, 124
    %v76 = vpop.permute.xlu0 %75
    %v78 = vadd.f32 %v70, %v76
    %s79 = sld [smem:[#allocation6 + $0x5]]
    %v80 = vstv %s79
    %v81 = vmul.f32 %v80, %v40
    %83 = vrot.lane.b32.xlu0 %v81, 123
    %v84 = vpop.permute.xlu0 %83
    %v86 = vadd.f32 %v78, %v84
    %s87 = sld [smem:[#allocation6 + $0x6]]
    %v88 = vstv %s87
    %v89 = vmul.f32 %v88, %v40
    %91 = vrot.lane.b32.xlu0 %v89, 122
    %v92 = vpop.permute.xlu0 %91
    %v94 = vadd.f32 %v86, %v92
    %s95 = sld [smem:[#allocation6 + $0x7]]
    %v96 = vstv %s95
    %v97 = vmul.f32 %v96, %v40
    %99 = vrot.lane.b32.xlu0 %v97, 121
    %v100 = vpop.permute.xlu0 %99
    %v102 = vadd.f32 %v94, %v100
    %s103 = sld [smem:[#allocation6 + $0x8]]
    %v104 = vstv %s103
    %v105 = vmul.f32 %v104, %v40
    %107 = vrot.lane.b32.xlu0 %v105, 120
    %v108 = vpop.permute.xlu0 %107
    %v110 = vadd.f32 %v102, %v108
    %s111 = sld [smem:[#allocation6 + $0x9]]
    %v112 = vstv %s111
    %v113 = vmul.f32 %v112, %v40
    %115 = vrot.lane.b32.xlu0 %v113, 119
    %v116 = vpop.permute.xlu0 %115
    %v118 = vadd.f32 %v110, %v116
    %vm119 = vcmask 7168
    %120 = vst.msk [vmem:[%s3] sm:$0xff] %vm119, %v118
    // Predicated region
    $region22: #{tpu_custom_call.1} parent=1 // pred_check
      _
    $region23: #{tpu_custom_call.1} parent=1 // pred_check_branch
      %122 = sbr.rel (0) target = $region25
    $region24: #{tpu_custom_call.1} parent=1 // pred_region
      _
    $region25: #{tpu_custom_call.1} parent=1 // pred_fallthru
      _
    // Predicated region
    $region26: #{tpu_custom_call.1} parent=1 // pred_check
      _
    $region27: #{tpu_custom_call.1} parent=1 // pred_check_branch
      %124 = sbr.rel (0) target = $region29
    $region28: #{tpu_custom_call.1} parent=1 // pred_region
      _
    $region29: #{tpu_custom_call.1} parent=1 // pred_fallthru
      _
    %125 = vsyncpa [#allocation4], 1
    %126 = vsyncpa [#allocation5], 1

</llo_original>
